<compile_context>
chip_gen: v7x
topology: tpu7x:2x2x1
jax: 0.10.0
libtpu: 0.0.40
codegen_flags: <defaults>
</compile_context>

<pallas_src>
import jax
import jax.numpy as jnp
from jax.experimental import pallas as pl
from jax.experimental.pallas import tpu as pltpu

LANE = 128  # TPU lane width; MXU tiles are 128-aligned on v5e/v6e/v7x


def _round_up(x, m):
    return (x + m - 1) // m * m


def _pad2(a, rows, cols):
    r, c = a.shape
    return jnp.pad(a, ((0, rows - r), (0, cols - c)))


def symbol_mlp_kernel(x_ref,
                      w1_ref, b1_ref,
                      ws1_ref, bs1_ref,
                      ws2_ref, bs2_ref,
                      w2_ref, b2_ref,
                      o_ref):
    """Fused Linear -> residual ReLU-MLP block -> Linear.  f32 accumulation throughout."""
    cdt = w1_ref.dtype                      # MXU input dtype (f32 or bf16 weights)
    x = x_ref[...].astype(cdt)

    # Linear(in_dim, hidden_dim)
    h = jnp.dot(x, w1_ref[...], preferred_element_type=jnp.float32) + b1_ref[...]

    # SymbolLayer(hidden_dim, hidden_dim): residual ReLU MLP (see TODO above)
    t = jnp.dot(h.astype(cdt), ws1_ref[...], preferred_element_type=jnp.float32) + bs1_ref[...]
    t = jnp.maximum(t, 0.0)
    t = jnp.dot(t.astype(cdt), ws2_ref[...], preferred_element_type=jnp.float32) + bs2_ref[...]
    t = jnp.maximum(t, 0.0)
    h = h + t

    # Linear(hidden_dim, out_dim)
    y = jnp.dot(h.astype(cdt), w2_ref[...], preferred_element_type=jnp.float32) + b2_ref[...]
    o_ref[...] = y.astype(o_ref.dtype)


def symbol_mlp(x, params, *, tm=256, compute_dtype=jnp.float32):
    """x: [N, in_dim] float32. params: unpadded weight dict (see init_params).

    Weights are stored as [fan_in, fan_out] (transposed vs. nn.Linear.weight);
    biases are [1, fan_out].  Returns [N, out_dim].

    Note: padding/casting below is jnp, so under jit it is constant-folded once per
    distinct parameter set; for a hot production path pre-pad the params instead.
    """
    N, in_dim = x.shape
    hidden_dim = params["w1"].shape[1]
    out_dim = params["w2"].shape[1]

    # Lane-dense, MXU-aligned feature dims.
    in_p = _round_up(in_dim, LANE)
    hid_p = _round_up(hidden_dim, LANE)
    out_p = _round_up(out_dim, LANE)

    # Row tiling: never make the tile bigger than (padded) N; pad N up to the tile.
    tm = min(tm, _round_up(N, 8))
    n_p = _round_up(N, tm)
    grid = (n_p // tm,)

    cdt = compute_dtype
    w1 = _pad2(params["w1"], in_p, hid_p).astype(cdt)
    ws1 = _pad2(params["ws1"], hid_p, hid_p).astype(cdt)
    ws2 = _pad2(params["ws2"], hid_p, hid_p).astype(cdt)
    w2 = _pad2(params["w2"], hid_p, out_p).astype(cdt)
    b1 = _pad2(params["b1"], 1, hid_p).astype(jnp.float32)
    bs1 = _pad2(params["bs1"], 1, hid_p).astype(jnp.float32)
    bs2 = _pad2(params["bs2"], 1, out_p if False else hid_p).astype(jnp.float32)
    b2 = _pad2(params["b2"], 1, out_p).astype(jnp.float32)
    x_p = jnp.pad(x, ((0, n_p - N), (0, in_p - in_dim)))

    full = lambda shape: pl.BlockSpec(shape, lambda i: (0, 0))

    # VMEM budget: pipeline double-buffers every block; activations need ~4 H-wide tiles.
    itemsize = jnp.dtype(cdt).itemsize
    wbytes = (w1.size + ws1.size + ws2.size + w2.size) * itemsize \
             + (b1.size + bs1.size + bs2.size + b2.size) * 4
    vmem_need = 2 * wbytes + 2 * 4 * tm * (in_p + out_p) + 4 * 4 * tm * hid_p
    vmem_limit = (min(int(1.5 * vmem_need), 64 * 1024 * 1024)
                  if vmem_need > 24 * 1024 * 1024 else None)

    flops = 2 * n_p * (in_p * hid_p + 2 * hid_p * hid_p + hid_p * out_p)
    bytes_accessed = x_p.size * 4 + wbytes + n_p * out_p * 4
    cost = pl.CostEstimate(flops=flops, transcendentals=0,
                           bytes_accessed=bytes_accessed)

    out = pl.pallas_call(
        symbol_mlp_kernel,
        out_shape=jax.ShapeDtypeStruct((n_p, out_p), x.dtype),
        grid_spec=pltpu.PrefetchScalarGridSpec(
            num_scalar_prefetch=0,
            grid=grid,
            in_specs=[
                pl.BlockSpec((tm, in_p), lambda i: (i, 0)),  # x row tile
                full((in_p, hid_p)),                         # w1   (resident)
                full((1, hid_p)),                            # b1
                full((hid_p, hid_p)),                        # ws1  (resident)
                full((1, hid_p)),                            # bs1
                full((hid_p, hid_p)),                        # ws2  (resident)
                full((1, hid_p)),                            # bs2
                full((hid_p, out_p)),                        # w2   (resident)
                full((1, out_p)),                            # b2
            ],
            out_specs=pl.BlockSpec((tm, out_p), lambda i: (i, 0)),
        ),
        compiler_params=pltpu.CompilerParams(
            dimension_semantics=("parallel",),   # row axis shards across v7x's 2 TCs
            vmem_limit_bytes=vmem_limit),
        cost_estimate=cost,
    )(x_p, w1, b1, ws1, bs1, ws2, bs2, w2, b2)

    return out[:N, :out_dim]


def init_params(key, in_dim, hidden_dim, out_dim):
    """Deterministic PyTorch-Linear-style init: U(-1/sqrt(fan_in), 1/sqrt(fan_in))."""
    def linear(k, fan_in, fan_out):
        kw, kb = jax.random.split(k)
        bound = 1.0 / jnp.sqrt(fan_in)
        w = jax.random.uniform(kw, (fan_in, fan_out), jnp.float32, -bound, bound)
        b = jax.random.uniform(kb, (1, fan_out), jnp.float32, -bound, bound)
        return w, b

    k1, k2, k3, k4 = jax.random.split(key, 4)
    w1, b1 = linear(k1, in_dim, hidden_dim)
    ws1, bs1 = linear(k2, hidden_dim, hidden_dim)
    ws2, bs2 = linear(k3, hidden_dim, hidden_dim)
    w2, b2 = linear(k4, hidden_dim, out_dim)
    return dict(w1=w1, b1=b1, ws1=ws1, bs1=bs1, ws2=ws2, bs2=bs2, w2=w2, b2=b2)


def symbol_mlp_ref(x, p):
    h = x @ p["w1"] + p["b1"]
    t = jnp.maximum(h @ p["ws1"] + p["bs1"], 0.0)
    t = jnp.maximum(t @ p["ws2"] + p["bs2"], 0.0)
    h = h + t
    return h @ p["w2"] + p["b2"]


if __name__ == "__main__":
    key = jax.random.PRNGKey(0)
    k_x, k_p = jax.random.split(key)

    N, in_dim, hidden_dim, out_dim = 256, 16, 32, 8
    x = jax.random.normal(k_x, (N, in_dim), jnp.float32)
    params = init_params(k_p, in_dim, hidden_dim, out_dim)

    # tm=128 -> grid=(2,): both v7x TensorCores get a step; v5e/v6e run them sequentially.
    out = symbol_mlp(x, params, tm=128)
    out = jax.block_until_ready(out)

    ref = symbol_mlp_ref(x, params)
    assert out.shape == (N, out_dim)
    assert jnp.allclose(out, ref, atol=1e-5, rtol=1e-5)

    print("KERNEL_OK")
</pallas_src>

<mosaic_0001>
module attributes {stable_mosaic.version = 11 : i64} {
  func.func @symbol_mlp_kernel(%arg0: i32, %arg1: memref<128x128xf32, #tpu.memory_space<vmem>>, %arg2: memref<128x128xf32, #tpu.memory_space<vmem>>, %arg3: memref<1x128xf32, #tpu.memory_space<vmem>>, %arg4: memref<128x128xf32, #tpu.memory_space<vmem>>, %arg5: memref<1x128xf32, #tpu.memory_space<vmem>>, %arg6: memref<128x128xf32, #tpu.memory_space<vmem>>, %arg7: memref<1x128xf32, #tpu.memory_space<vmem>>, %arg8: memref<128x128xf32, #tpu.memory_space<vmem>>, %arg9: memref<1x128xf32, #tpu.memory_space<vmem>>, %arg10: memref<128x128xf32, #tpu.memory_space<vmem>>) attributes {dimension_semantics = [#tpu.dimension_semantics<parallel>], iteration_bounds = array<i64: 2>, scalar_prefetch = 0 : i64, scratch_operands = 0 : i64, tpu.core_type = #tpu.core_type<tc>, window_params = [{transform_indices = @transform_0, window_bounds = array<i64: 128, 128>}, {pipeline_mode = #tpu.pipeline_mode<synchronous>, transform_indices = @transform_1, window_bounds = array<i64: 128, 128>}, {pipeline_mode = #tpu.pipeline_mode<synchronous>, transform_indices = @transform_2, window_bounds = array<i64: 1, 128>}, {pipeline_mode = #tpu.pipeline_mode<synchronous>, transform_indices = @transform_3, window_bounds = array<i64: 128, 128>}, {pipeline_mode = #tpu.pipeline_mode<synchronous>, transform_indices = @transform_4, window_bounds = array<i64: 1, 128>}, {pipeline_mode = #tpu.pipeline_mode<synchronous>, transform_indices = @transform_5, window_bounds = array<i64: 128, 128>}, {pipeline_mode = #tpu.pipeline_mode<synchronous>, transform_indices = @transform_6, window_bounds = array<i64: 1, 128>}, {pipeline_mode = #tpu.pipeline_mode<synchronous>, transform_indices = @transform_7, window_bounds = array<i64: 128, 128>}, {pipeline_mode = #tpu.pipeline_mode<synchronous>, transform_indices = @transform_8, window_bounds = array<i64: 1, 128>}, {transform_indices = @transform_9, window_bounds = array<i64: 128, 128>}]} {
    %c0 = arith.constant 0 : index
    %c0_0 = arith.constant 0 : index
    %0 = vector.load %arg1[%c0, %c0_0] : memref<128x128xf32, #tpu.memory_space<vmem>>, vector<128x128xf32>
    %c0_1 = arith.constant 0 : index
    %c0_2 = arith.constant 0 : index
    %1 = vector.load %arg2[%c0_1, %c0_2] : memref<128x128xf32, #tpu.memory_space<vmem>>, vector<128x128xf32>
    %cst = arith.constant dense<0.000000e+00> : vector<128x128xf32>
    %2 = tpu.matmul %0, %1, %cst {dimension_numbers = #tpu.dot_dimension_numbers<[1], [0], [0], [1], [0, 0, 1, 1], [], []>} : vector<128x128xf32>, vector<128x128xf32>, vector<128x128xf32> -> vector<128x128xf32>
    %c0_3 = arith.constant 0 : index
    %c0_4 = arith.constant 0 : index
    %3 = vector.load %arg3[%c0_3, %c0_4] : memref<1x128xf32, #tpu.memory_space<vmem>>, vector<1x128xf32>
    %4 = vector.broadcast %3 : vector<1x128xf32> to vector<128x128xf32>
    %5 = arith.addf %2, %4 : vector<128x128xf32>
    %c0_5 = arith.constant 0 : index
    %c0_6 = arith.constant 0 : index
    %6 = vector.load %arg4[%c0_5, %c0_6] : memref<128x128xf32, #tpu.memory_space<vmem>>, vector<128x128xf32>
    %cst_7 = arith.constant dense<0.000000e+00> : vector<128x128xf32>
    %7 = tpu.matmul %5, %6, %cst_7 {dimension_numbers = #tpu.dot_dimension_numbers<[1], [0], [0], [1], [0, 0, 1, 1], [], []>} : vector<128x128xf32>, vector<128x128xf32>, vector<128x128xf32> -> vector<128x128xf32>
    %c0_8 = arith.constant 0 : index
    %c0_9 = arith.constant 0 : index
    %8 = vector.load %arg5[%c0_8, %c0_9] : memref<1x128xf32, #tpu.memory_space<vmem>>, vector<1x128xf32>
    %9 = vector.broadcast %8 : vector<1x128xf32> to vector<128x128xf32>
    %10 = arith.addf %7, %9 : vector<128x128xf32>
    %cst_10 = arith.constant 0.000000e+00 : f32
    %11 = vector.broadcast %cst_10 : f32 to vector<128x128xf32>
    %12 = arith.maximumf %10, %11 : vector<128x128xf32>
    %c0_11 = arith.constant 0 : index
    %c0_12 = arith.constant 0 : index
    %13 = vector.load %arg6[%c0_11, %c0_12] : memref<128x128xf32, #tpu.memory_space<vmem>>, vector<128x128xf32>
    %cst_13 = arith.constant dense<0.000000e+00> : vector<128x128xf32>
    %14 = tpu.matmul %12, %13, %cst_13 {dimension_numbers = #tpu.dot_dimension_numbers<[1], [0], [0], [1], [0, 0, 1, 1], [], []>} : vector<128x128xf32>, vector<128x128xf32>, vector<128x128xf32> -> vector<128x128xf32>
    %c0_14 = arith.constant 0 : index
    %c0_15 = arith.constant 0 : index
    %15 = vector.load %arg7[%c0_14, %c0_15] : memref<1x128xf32, #tpu.memory_space<vmem>>, vector<1x128xf32>
    %16 = vector.broadcast %15 : vector<1x128xf32> to vector<128x128xf32>
    %17 = arith.addf %14, %16 : vector<128x128xf32>
    %cst_16 = arith.constant 0.000000e+00 : f32
    %18 = vector.broadcast %cst_16 : f32 to vector<128x128xf32>
    %19 = arith.maximumf %17, %18 : vector<128x128xf32>
    %20 = arith.addf %5, %19 : vector<128x128xf32>
    %c0_17 = arith.constant 0 : index
    %c0_18 = arith.constant 0 : index
    %21 = vector.load %arg8[%c0_17, %c0_18] : memref<128x128xf32, #tpu.memory_space<vmem>>, vector<128x128xf32>
    %cst_19 = arith.constant dense<0.000000e+00> : vector<128x128xf32>
    %22 = tpu.matmul %20, %21, %cst_19 {dimension_numbers = #tpu.dot_dimension_numbers<[1], [0], [0], [1], [0, 0, 1, 1], [], []>} : vector<128x128xf32>, vector<128x128xf32>, vector<128x128xf32> -> vector<128x128xf32>
    %c0_20 = arith.constant 0 : index
    %c0_21 = arith.constant 0 : index
    %23 = vector.load %arg9[%c0_20, %c0_21] : memref<1x128xf32, #tpu.memory_space<vmem>>, vector<1x128xf32>
    %24 = vector.broadcast %23 : vector<1x128xf32> to vector<128x128xf32>
    %25 = arith.addf %22, %24 : vector<128x128xf32>
    %c0_22 = arith.constant 0 : index
    %c0_23 = arith.constant 0 : index
    %26 = vector.load %arg10[%c0_22, %c0_23] : memref<128x128xf32, #tpu.memory_space<vmem>>, vector<128x128xf32>
    tpu.vector_store %arg10[%c0_22, %c0_23], %25 {strides = array<i32>} : memref<128x128xf32, #tpu.memory_space<vmem>>, vector<128x128xf32>,
    return
  }
  func.func @transform_0(%arg0: i32) -> (i32, i32) {
    %c0_i32 = arith.constant 0 : i32
    %c0_i32_0 = arith.constant 0 : i32
    return %arg0, %c0_i32 : i32, i32
  }
  func.func @transform_1(%arg0: i32) -> (i32, i32) {
    %c0_i32 = arith.constant 0 : i32
    %c0_i32_0 = arith.constant 0 : i32
    %c0_i32_1 = arith.constant 0 : i32
    return %c0_i32, %c0_i32_0 : i32, i32
  }
  func.func @transform_2(%arg0: i32) -> (i32, i32) {
    %c0_i32 = arith.constant 0 : i32
    %c0_i32_0 = arith.constant 0 : i32
    %c0_i32_1 = arith.constant 0 : i32
    return %c0_i32, %c0_i32_0 : i32, i32
  }
  func.func @transform_3(%arg0: i32) -> (i32, i32) {
    %c0_i32 = arith.constant 0 : i32
    %c0_i32_0 = arith.constant 0 : i32
    %c0_i32_1 = arith.constant 0 : i32
    return %c0_i32, %c0_i32_0 : i32, i32
  }
  func.func @transform_4(%arg0: i32) -> (i32, i32) {
    %c0_i32 = arith.constant 0 : i32
    %c0_i32_0 = arith.constant 0 : i32
    %c0_i32_1 = arith.constant 0 : i32
    return %c0_i32, %c0_i32_0 : i32, i32
  }
  func.func @transform_5(%arg0: i32) -> (i32, i32) {
    %c0_i32 = arith.constant 0 : i32
    %c0_i32_0 = arith.constant 0 : i32
    %c0_i32_1 = arith.constant 0 : i32
    return %c0_i32, %c0_i32_0 : i32, i32
  }
  func.func @transform_6(%arg0: i32) -> (i32, i32) {
    %c0_i32 = arith.constant 0 : i32
    %c0_i32_0 = arith.constant 0 : i32
    %c0_i32_1 = arith.constant 0 : i32
    return %c0_i32, %c0_i32_0 : i32, i32
  }
  func.func @transform_7(%arg0: i32) -> (i32, i32) {
    %c0_i32 = arith.constant 0 : i32
    %c0_i32_0 = arith.constant 0 : i32
    %c0_i32_1 = arith.constant 0 : i32
    return %c0_i32, %c0_i32_0 : i32, i32
  }
  func.func @transform_8(%arg0: i32) -> (i32, i32) {
    %c0_i32 = arith.constant 0 : i32
    %c0_i32_0 = arith.constant 0 : i32
    %c0_i32_1 = arith.constant 0 : i32
    return %c0_i32, %c0_i32_0 : i32, i32
  }
  func.func @transform_9(%arg0: i32) -> (i32, i32) {
    %c0_i32 = arith.constant 0 : i32
    %c0_i32_0 = arith.constant 0 : i32
    return %arg0, %c0_i32 : i32, i32
  }
}

</mosaic_0001>

<llo_original>
// kernel: tpu_custom_call.1
$region0: #{tpu_custom_call.1}
  #allocation0 [shape = 'u32[]', space=smem, size = 0x4, offset = 0x4, fixed_abs, tag = 'smem constant byte address 0x4 - core index']
  #allocation1 [shape = 'u32[144,128]{1,0:T(1,128)}', space=vmem, size = 0x12000, scoped, tag = 'internal scratch']
  %s0 = inlined_call_operand.hbm [shape: f32[256,128], index: 0, kind: input, shape index: {}]
  %s1 = inlined_call_operand.hbm [shape: f32[128,128], index: 1, kind: input, shape index: {}]
  %s2 = inlined_call_operand.vmem [shape: f32[1,128], index: 2, kind: input, shape index: {}]
  %s3 = inlined_call_operand.hbm [shape: f32[128,128], index: 3, kind: input, shape index: {}]
  %s4 = inlined_call_operand.vmem [shape: f32[1,128], index: 4, kind: input, shape index: {}]
  %s5 = inlined_call_operand.hbm [shape: f32[128,128], index: 5, kind: input, shape index: {}]
  %s6 = inlined_call_operand.vmem [shape: f32[1,128], index: 6, kind: input, shape index: {}]
  %s7 = inlined_call_operand.hbm [shape: f32[128,128], index: 7, kind: input, shape index: {}]
  %s8 = inlined_call_operand.vmem [shape: f32[1,128], index: 8, kind: input, shape index: {}]
  %s9 = inlined_call_operand.hbm [shape: f32[256,128], index: 9, kind: output, shape index: {}]
  %s10 = sld [smem:[#allocation0]]
  $region89: #{tpu_custom_call.1} parent=0
    _
  %s12 = ssub.s32 1, %s10
  %s13 = scalar_select 0, %s12, %s10
  $region1: #{tpu_custom_call.1} parent=0
    #allocation2 [shape = 'u8[131072]{0}', space=vmem, size = 0x20000, scoped, tag = 'input window, operand 0']
    #allocation3 [shape = 's32[2]{0}', space=sflag, size = 0x8, scoped, tag = 'scoped memory for tpu_custom_call.1']
    #allocation4 [shape = 's32[2]{0}', space=sflag, size = 0x8, scoped, tag = 'scoped memory for tpu_custom_call.1']
    #allocation5 [shape = 'u8[65536]{0}', space=vmem, size = 0x10000, scoped, tag = 'input window, operand 1, single buffered']
    #allocation6 [shape = 's32[1]{0}', space=sflag, size = 0x4, scoped, tag = 'scoped memory for tpu_custom_call.1']
    #allocation7 [shape = 'u8[65536]{0}', space=vmem, size = 0x10000, scoped, tag = 'input window, operand 3, single buffered']
    #allocation8 [shape = 'u8[65536]{0}', space=vmem, size = 0x10000, scoped, tag = 'input window, operand 5, single buffered']
    #allocation9 [shape = 's32[1]{0}', space=sflag, size = 0x4, scoped, tag = 'scoped memory for tpu_custom_call.1']
    #allocation10 [shape = 'u8[65536]{0}', space=vmem, size = 0x10000, scoped, tag = 'input window, operand 7, single buffered']
    #allocation11 [shape = 'u8[131072]{0}', space=vmem, size = 0x20000, scoped, tag = 'output window, operand 0']
    %14 = vsyncpa [#allocation3], 0
    %s15 = scalar_lea.sflag [#allocation3], 1
    %16 = vsyncpa %s15, 0
    %17 = vsyncpa [#allocation6], 0
    %18 = vsyncpa [#allocation9], 0
    %19 = vsyncpa [#allocation4], 0
    %s20 = scalar_lea.sflag [#allocation4], 1
    %21 = vsyncpa %s20, 0
    loop: start=0, step=1, limit=4
    $region2: #{tpu_custom_call.1} parent=1 // loop_pre_header
      _
    $region3: #{tpu_custom_call.1} parent=1 // loop_header
      %s23 = sphi 0, %s27
      %p24 = scmp.ge.s32.totalorder %s23, 4
      %s33 = sphi 0, %s35
      %s36 = sphi 0, %s33
      %s37 = sphi 0, %s36
      %s53 = sphi 0, %s37
      %s57 = sphi 0, %s57
      %s59 = sphi 0, %s57
      %s60 = sphi 0, %s59
      %s74 = sphi 0, %s60
      %s78 = sphi 0, %s78
      %s80 = sphi 0, %s78
      %s81 = sphi 0, %s80
      %s95 = sphi 0, %s81
      %s99 = sphi 0, %s99
      %s101 = sphi 0, %s99
      %s102 = sphi 0, %s101
      %s116 = sphi 0, %s102
      %s120 = sphi 0, %s120
      %s122 = sphi 0, %s120
      %s123 = sphi 0, %s122
      %s137 = sphi 0, %s123
      %s141 = sphi 0, %s141
      %s143 = sphi 0, %s141
      %s144 = sphi 0, %s143
      %s158 = sphi 0, %s144
      %s162 = sphi 0, %s162
      %s164 = sphi 0, %s162
      %s165 = sphi 0, %s164
      %s179 = sphi 0, %s165
      %s183 = sphi 0, %s183
      %s185 = sphi 0, %s183
      %s186 = sphi 0, %s185
      %s200 = sphi 0, %s186
      %s204 = sphi 0, %s204
      %s206 = sphi 0, %s204
      %s207 = sphi 0, %s206
      %s221 = sphi 0, %s207
      %s227 = sphi 0, %s229
      %s230 = sphi 0, %s227
      %s231 = sphi 0, %s230
      %s247 = sphi 0, %s231
    $region4: #{tpu_custom_call.1} parent=1 // loop_header_branch
      %26 = sbr.rel (%p24) target = $region8
    $region5: #{tpu_custom_call.1} parent=1 // loop_body
      %s28 = ssub.s32 %s23, 1
      %s29 = ssub.s32 %s23, 2
      %s30 = sadd.s32 %s23, 1
      %s31 = ssub.s32 %s23, %s30
      %p32 = scmp.eq.s32.totalorder %s31, 0
      %s34 = sadd.s32 %s33, 1
      %s35 = scalar_select %p32, %s33, %s34
      %p38 = pneg %p32
      %p39 = scmp.eq.s32.totalorder %s23, 1
      %p40 = por %p38, %p39
      %p41 = scmp.ne.s32.totalorder %s33, %s36
      %p42 = scmp.eq.s32.totalorder %s23, 0
      %p43 = por %p41, %p42
      %p44 = scmp.ne.s32.totalorder %s33, %s36
      %p45 = scmp.eq.s32.totalorder %s28, 1
      %p46 = por %p44, %p45
      %p47 = scmp.ne.s32.totalorder %s36, %s37
      %p48 = scmp.eq.s32.totalorder %s28, 0
      %p49 = por %p47, %p48
      %p50 = scmp.ne.s32.totalorder %s36, %s37
      %p51 = scmp.eq.s32.totalorder %s29, 1
      %p52 = por %p50, %p51
      %p54 = scmp.ne.s32.totalorder %s37, %s53
      %p55 = scmp.eq.s32.totalorder %s29, 0
      %p56 = por %p54, %p55
      %s58 = sadd.s32 %s57, 1
      %p61 = scmp.eq.s32.totalorder %s23, 1
      %p62 = scmp.ne.s32.totalorder %s57, %s59
      %p63 = scmp.eq.s32.totalorder %s23, 0
      %p64 = por %p62, %p63
      %p65 = scmp.ne.s32.totalorder %s57, %s59
      %p66 = scmp.eq.s32.totalorder %s28, 1
      %p67 = por %p65, %p66
      %p68 = scmp.ne.s32.totalorder %s59, %s60
      %p69 = scmp.eq.s32.totalorder %s28, 0
      %p70 = por %p68, %p69
      %p71 = scmp.ne.s32.totalorder %s59, %s60
      %p72 = scmp.eq.s32.totalorder %s29, 1
      %p73 = por %p71, %p72
      %p75 = scmp.ne.s32.totalorder %s60, %s74
      %p76 = scmp.eq.s32.totalorder %s29, 0
      %p77 = por %p75, %p76
      %s79 = sadd.s32 %s78, 1
      %p82 = scmp.eq.s32.totalorder %s23, 1
      %p83 = scmp.ne.s32.totalorder %s78, %s80
      %p84 = scmp.eq.s32.totalorder %s23, 0
      %p85 = por %p83, %p84
      %p86 = scmp.ne.s32.totalorder %s78, %s80
      %p87 = scmp.eq.s32.totalorder %s28, 1
      %p88 = por %p86, %p87
      %p89 = scmp.ne.s32.totalorder %s80, %s81
      %p90 = scmp.eq.s32.totalorder %s28, 0
      %p91 = por %p89, %p90
      %p92 = scmp.ne.s32.totalorder %s80, %s81
      %p93 = scmp.eq.s32.totalorder %s29, 1
      %p94 = por %p92, %p93
      %p96 = scmp.ne.s32.totalorder %s81, %s95
      %p97 = scmp.eq.s32.totalorder %s29, 0
      %p98 = por %p96, %p97
      %s100 = sadd.s32 %s99, 1
      %p103 = scmp.eq.s32.totalorder %s23, 1
      %p104 = scmp.ne.s32.totalorder %s99, %s101
      %p105 = scmp.eq.s32.totalorder %s23, 0
      %p106 = por %p104, %p105
      %p107 = scmp.ne.s32.totalorder %s99, %s101
      %p108 = scmp.eq.s32.totalorder %s28, 1
      %p109 = por %p107, %p108
      %p110 = scmp.ne.s32.totalorder %s101, %s102
      %p111 = scmp.eq.s32.totalorder %s28, 0
      %p112 = por %p110, %p111
      %p113 = scmp.ne.s32.totalorder %s101, %s102
      %p114 = scmp.eq.s32.totalorder %s29, 1
      %p115 = por %p113, %p114
      %p117 = scmp.ne.s32.totalorder %s102, %s116
      %p118 = scmp.eq.s32.totalorder %s29, 0
      %p119 = por %p117, %p118
      %s121 = sadd.s32 %s120, 1
      %p124 = scmp.eq.s32.totalorder %s23, 1
      %p125 = scmp.ne.s32.totalorder %s120, %s122
      %p126 = scmp.eq.s32.totalorder %s23, 0
      %p127 = por %p125, %p126
      %p128 = scmp.ne.s32.totalorder %s120, %s122
      %p129 = scmp.eq.s32.totalorder %s28, 1
      %p130 = por %p128, %p129
      %p131 = scmp.ne.s32.totalorder %s122, %s123
      %p132 = scmp.eq.s32.totalorder %s28, 0
      %p133 = por %p131, %p132
      %p134 = scmp.ne.s32.totalorder %s122, %s123
      %p135 = scmp.eq.s32.totalorder %s29, 1
      %p136 = por %p134, %p135
      %p138 = scmp.ne.s32.totalorder %s123, %s137
      %p139 = scmp.eq.s32.totalorder %s29, 0
      %p140 = por %p138, %p139
      %s142 = sadd.s32 %s141, 1
      %p145 = scmp.eq.s32.totalorder %s23, 1
      %p146 = scmp.ne.s32.totalorder %s141, %s143
      %p147 = scmp.eq.s32.totalorder %s23, 0
      %p148 = por %p146, %p147
      %p149 = scmp.ne.s32.totalorder %s141, %s143
      %p150 = scmp.eq.s32.totalorder %s28, 1
      %p151 = por %p149, %p150
      %p152 = scmp.ne.s32.totalorder %s143, %s144
      %p153 = scmp.eq.s32.totalorder %s28, 0
      %p154 = por %p152, %p153
      %p155 = scmp.ne.s32.totalorder %s143, %s144
      %p156 = scmp.eq.s32.totalorder %s29, 1
      %p157 = por %p155, %p156
      %p159 = scmp.ne.s32.totalorder %s144, %s158
      %p160 = scmp.eq.s32.totalorder %s29, 0
      %p161 = por %p159, %p160
      %s163 = sadd.s32 %s162, 1
      %p166 = scmp.eq.s32.totalorder %s23, 1
      %p167 = scmp.ne.s32.totalorder %s162, %s164
      %p168 = scmp.eq.s32.totalorder %s23, 0
      %p169 = por %p167, %p168
      %p170 = scmp.ne.s32.totalorder %s162, %s164
      %p171 = scmp.eq.s32.totalorder %s28, 1
      %p172 = por %p170, %p171
      %p173 = scmp.ne.s32.totalorder %s164, %s165
      %p174 = scmp.eq.s32.totalorder %s28, 0
      %p175 = por %p173, %p174
      %p176 = scmp.ne.s32.totalorder %s164, %s165
      %p177 = scmp.eq.s32.totalorder %s29, 1
      %p178 = por %p176, %p177
      %p180 = scmp.ne.s32.totalorder %s165, %s179
      %p181 = scmp.eq.s32.totalorder %s29, 0
      %p182 = por %p180, %p181
      %s184 = sadd.s32 %s183, 1
      %p187 = scmp.eq.s32.totalorder %s23, 1
      %p188 = scmp.ne.s32.totalorder %s183, %s185
      %p189 = scmp.eq.s32.totalorder %s23, 0
      %p190 = por %p188, %p189
      %p191 = scmp.ne.s32.totalorder %s183, %s185
      %p192 = scmp.eq.s32.totalorder %s28, 1
      %p193 = por %p191, %p192
      %p194 = scmp.ne.s32.totalorder %s185, %s186
      %p195 = scmp.eq.s32.totalorder %s28, 0
      %p196 = por %p194, %p195
      %p197 = scmp.ne.s32.totalorder %s185, %s186
      %p198 = scmp.eq.s32.totalorder %s29, 1
      %p199 = por %p197, %p198
      %p201 = scmp.ne.s32.totalorder %s186, %s200
      %p202 = scmp.eq.s32.totalorder %s29, 0
      %p203 = por %p201, %p202
      %s205 = sadd.s32 %s204, 1
      %p208 = scmp.eq.s32.totalorder %s23, 1
      %p209 = scmp.ne.s32.totalorder %s204, %s206
      %p210 = scmp.eq.s32.totalorder %s23, 0
      %p211 = por %p209, %p210
      %p212 = scmp.ne.s32.totalorder %s204, %s206
      %p213 = scmp.eq.s32.totalorder %s28, 1
      %p214 = por %p212, %p213
      %p215 = scmp.ne.s32.totalorder %s206, %s207
      %p216 = scmp.eq.s32.totalorder %s28, 0
      %p217 = por %p215, %p216
      %p218 = scmp.ne.s32.totalorder %s206, %s207
      %p219 = scmp.eq.s32.totalorder %s29, 1
      %p220 = por %p218, %p219
      %p222 = scmp.ne.s32.totalorder %s207, %s221
      %p223 = scmp.eq.s32.totalorder %s29, 0
      %p224 = por %p222, %p223
      %s225 = ssub.s32 %s23, %s30
      %p226 = scmp.eq.s32.totalorder %s225, 0
      %s228 = sadd.s32 %s227, 1
      %s229 = scalar_select %p226, %s227, %s228
      %p232 = pneg %p226
      %p233 = scmp.eq.s32.totalorder %s23, 1
      %p234 = por %p232, %p233
      %p235 = scmp.ne.s32.totalorder %s227, %s230
      %p236 = scmp.eq.s32.totalorder %s23, 0
      %p237 = por %p235, %p236
      %p238 = scmp.ne.s32.totalorder %s227, %s230
      %p239 = scmp.eq.s32.totalorder %s28, 1
      %p240 = por %p238, %p239
      %p241 = scmp.ne.s32.totalorder %s230, %s231
      %p242 = scmp.eq.s32.totalorder %s28, 0
      %p243 = por %p241, %p242
      %p244 = scmp.ne.s32.totalorder %s230, %s231
      %p245 = scmp.eq.s32.totalorder %s29, 1
      %p246 = por %p244, %p245
      %p248 = scmp.ne.s32.totalorder %s231, %s247
      %p249 = scmp.eq.s32.totalorder %s29, 0
      %p250 = por %p248, %p249
      %p251 = scmp.le.s32.totalorder 1, %s23
      %p252 = scmp.lt.s32.totalorder %s23, 3
      %p253 = pnand %p251, %p252
      %p254 = pneg %p253
      // Predicated region
      $region9: #{tpu_custom_call.1} parent=5 // pred_check
        _
      $region10: #{tpu_custom_call.1} parent=5 // pred_check_branch
        %256 = sbr.rel (%p253) target = $region12
      $region11: #{tpu_custom_call.1} parent=5 // pred_region
        %s257 = ssub.s32 %s23, 1
        // Predicated region
        $region13: #{tpu_custom_call.1} parent=11 // pred_check
          %p258 = pneg %p70
        $region14: #{tpu_custom_call.1} parent=11 // pred_check_branch
          %260 = sbr.rel (%p258) target = $region16
        $region15: #{tpu_custom_call.1} parent=11 // pred_region
          %s262 = ssub.s32 2048, 2048
          %263 = vsyncadd [#allocation6], %s262
          %s264 = sshll.u32 [#allocation5], 4
          %s265 = int_to_ptr.vmem [resolvable:$true] %s264
          %270 = dma.hbm_to_vmem [thread:$0]  %s1, 2048, %s265, [#allocation6], 128, 128, 8
        $region16: #{tpu_custom_call.1} parent=11 // pred_fallthru
          _
        // Predicated region
        $region17: #{tpu_custom_call.1} parent=11 // pred_check
          %p271 = pneg %p91
        $region18: #{tpu_custom_call.1} parent=11 // pred_check_branch
          %273 = sbr.rel (%p271) target = $region20
        $region19: #{tpu_custom_call.1} parent=11 // pred_region
          _
        $region20: #{tpu_custom_call.1} parent=11 // pred_fallthru
          _
        // Predicated region
        $region21: #{tpu_custom_call.1} parent=11 // pred_check
          %p274 = pneg %p112
        $region22: #{tpu_custom_call.1} parent=11 // pred_check_branch
          %276 = sbr.rel (%p274) target = $region24
        $region23: #{tpu_custom_call.1} parent=11 // pred_region
          %s278 = ssub.s32 2048, 2048
          %279 = vsyncadd [#allocation6], %s278
          %s280 = sshll.u32 [#allocation7], 4
          %s281 = int_to_ptr.vmem [resolvable:$true] %s280
          %286 = dma.hbm_to_vmem [thread:$0]  %s3, 2048, %s281, [#allocation6], 128, 128, 8
        $region24: #{tpu_custom_call.1} parent=11 // pred_fallthru
          _
        // Predicated region
        $region25: #{tpu_custom_call.1} parent=11 // pred_check
          %p287 = pneg %p133
        $region26: #{tpu_custom_call.1} parent=11 // pred_check_branch
          %289 = sbr.rel (%p287) target = $region28
        $region27: #{tpu_custom_call.1} parent=11 // pred_region
          _
        $region28: #{tpu_custom_call.1} parent=11 // pred_fallthru
          _
        // Predicated region
        $region29: #{tpu_custom_call.1} parent=11 // pred_check
          %p290 = pneg %p154
        $region30: #{tpu_custom_call.1} parent=11 // pred_check_branch
          %292 = sbr.rel (%p290) target = $region32
        $region31: #{tpu_custom_call.1} parent=11 // pred_region
          %s294 = ssub.s32 2048, 2048
          %295 = vsyncadd [#allocation9], %s294
          %s296 = sshll.u32 [#allocation8], 4
          %s297 = int_to_ptr.vmem [resolvable:$true] %s296
          %302 = dma.hbm_to_vmem [thread:$0]  %s5, 2048, %s297, [#allocation9], 128, 128, 8
        $region32: #{tpu_custom_call.1} parent=11 // pred_fallthru
          _
        // Predicated region
        $region33: #{tpu_custom_call.1} parent=11 // pred_check
          %p303 = pneg %p175
        $region34: #{tpu_custom_call.1} parent=11 // pred_check_branch
          %305 = sbr.rel (%p303) target = $region36
        $region35: #{tpu_custom_call.1} parent=11 // pred_region
          _
        $region36: #{tpu_custom_call.1} parent=11 // pred_fallthru
          _
        // Predicated region
        $region37: #{tpu_custom_call.1} parent=11 // pred_check
          %p306 = pneg %p196
        $region38: #{tpu_custom_call.1} parent=11 // pred_check_branch
          %308 = sbr.rel (%p306) target = $region40
        $region39: #{tpu_custom_call.1} parent=11 // pred_region
          %s310 = ssub.s32 2048, 2048
          %311 = vsyncadd [#allocation9], %s310
          %s312 = sshll.u32 [#allocation10], 4
          %s313 = int_to_ptr.vmem [resolvable:$true] %s312
          %318 = dma.hbm_to_vmem [thread:$0]  %s7, 2048, %s313, [#allocation9], 128, 128, 8
        $region40: #{tpu_custom_call.1} parent=11 // pred_fallthru
          _
        // Predicated region
        $region41: #{tpu_custom_call.1} parent=11 // pred_check
          %p319 = pneg %p217
        $region42: #{tpu_custom_call.1} parent=11 // pred_check_branch
          %321 = sbr.rel (%p319) target = $region44
        $region43: #{tpu_custom_call.1} parent=11 // pred_region
          _
        $region44: #{tpu_custom_call.1} parent=11 // pred_fallthru
          _
      $region12: #{tpu_custom_call.1} parent=5 // pred_fallthru
        _
      %p322 = scmp.lt.s32.totalorder %s23, 2
      // Predicated region
      $region45: #{tpu_custom_call.1} parent=5 // pred_check
        %p323 = pneg %p322
      $region46: #{tpu_custom_call.1} parent=5 // pred_check_branch
        %325 = sbr.rel (%p323) target = $region48
      $region47: #{tpu_custom_call.1} parent=5 // pred_region
        // Predicated region
        $region49: #{tpu_custom_call.1} parent=47 // pred_check
          %p326 = pneg %p43
        $region50: #{tpu_custom_call.1} parent=47 // pred_check_branch
          %328 = sbr.rel (%p326) target = $region52
        $region51: #{tpu_custom_call.1} parent=47 // pred_region
          %s329 = sand.u32 %s33, 1
          %s330 = scalar_lea.sflag [#allocation3], %s329
          %s331 = sand.u32 %s33, 1
          %s332 = smul.addr %s331, 128
          %s333 = scalar_lea.vmem [#allocation2], %s332
          %s334 = smul.u32 16, %s23
          %s336 = ssub.s32 2048, 2048
          %337 = vsyncadd %s330, %s336
          %s338 = smul.addr %s334, 128
          %s339 = scalar_lea.hbm %s0, %s338
          %s340 = sshll.u32 %s333, 4
          %s341 = int_to_ptr.vmem [resolvable:$true] %s340
          %346 = dma.hbm_to_vmem [thread:$0]  %s339, 2048, %s341, %s330, 128, 128, 8
        $region52: #{tpu_custom_call.1} parent=47 // pred_fallthru
          _
      $region48: #{tpu_custom_call.1} parent=5 // pred_fallthru
        _
      %p347 = scmp.le.s32.totalorder 1, %s23
      %p348 = scmp.lt.s32.totalorder %s23, 3
      %p349 = pnand %p347, %p348
      %p350 = pneg %p349
      // Predicated region
      $region53: #{tpu_custom_call.1} parent=5 // pred_check
        _
      $region54: #{tpu_custom_call.1} parent=5 // pred_check_branch
        %352 = sbr.rel (%p349) target = $region56
      $region55: #{tpu_custom_call.1} parent=5 // pred_region
        %s353 = ssub.s32 %s23, 1
        %s354 = sand.u32 %s36, 1
        %s355 = scalar_lea.sflag [#allocation3], %s354
        %s356 = sand.u32 %s36, 1
        %s357 = smul.addr %s356, 128
        %s358 = scalar_lea.vmem [#allocation2], %s357
        // Predicated region
        $region57: #{tpu_custom_call.1} parent=55 // pred_check
          %p359 = pneg %p49
        $region58: #{tpu_custom_call.1} parent=55 // pred_check_branch
          %361 = sbr.rel (%p359) target = $region60
        $region59: #{tpu_custom_call.1} parent=55 // pred_region
          %362 = dma.done %s355, 2048
        $region60: #{tpu_custom_call.1} parent=55 // pred_fallthru
          _
        // Predicated region
        $region61: #{tpu_custom_call.1} parent=55 // pred_check
          %p363 = pneg %p70
        $region62: #{tpu_custom_call.1} parent=55 // pred_check_branch
          %365 = sbr.rel (%p363) target = $region64
        $region63: #{tpu_custom_call.1} parent=55 // pred_region
          %366 = dma.done [#allocation6], 2048
        $region64: #{tpu_custom_call.1} parent=55 // pred_fallthru
          _
        // Predicated region
        $region65: #{tpu_custom_call.1} parent=55 // pred_check
          %p367 = pneg %p112
        $region66: #{tpu_custom_call.1} parent=55 // pred_check_branch
          %369 = sbr.rel (%p367) target = $region68
        $region67: #{tpu_custom_call.1} parent=55 // pred_region
          %370 = dma.done [#allocation6], 2048
        $region68: #{tpu_custom_call.1} parent=55 // pred_fallthru
          _
        // Predicated region
        $region69: #{tpu_custom_call.1} parent=55 // pred_check
          %p371 = pneg %p154
        $region70: #{tpu_custom_call.1} parent=55 // pred_check_branch
          %373 = sbr.rel (%p371) target = $region72
        $region71: #{tpu_custom_call.1} parent=55 // pred_region
          %374 = dma.done [#allocation9], 2048
        $region72: #{tpu_custom_call.1} parent=55 // pred_fallthru
          _
        // Predicated region
        $region73: #{tpu_custom_call.1} parent=55 // pred_check
          %p375 = pneg %p196
        $region74: #{tpu_custom_call.1} parent=55 // pred_check_branch
          %377 = sbr.rel (%p375) target = $region76
        $region75: #{tpu_custom_call.1} parent=55 // pred_region
          %378 = dma.done [#allocation9], 2048
        $region76: #{tpu_custom_call.1} parent=55 // pred_fallthru
          _
        %s379 = sand.u32 %s36, 1
        %s380 = scalar_lea.sflag [#allocation3], %s379
        %s381 = sand.u32 %s36, 1
        %s382 = smul.addr %s381, 128
        %s383 = scalar_lea.vmem [#allocation2], %s382
        %p384 = pneg %p49
        %p385 = pneg %p46
        %p386 = pneg %p70
        %p387 = pneg %p67
        %p388 = pneg %p91
        %p389 = pneg %p88
        %p390 = pneg %p112
        %p391 = pneg %p109
        %p392 = pneg %p133
        %p393 = pneg %p130
        %p394 = pneg %p154
        %p395 = pneg %p151
        %p396 = pneg %p175
        %p397 = pneg %p172
        %p398 = pneg %p196
        %p399 = pneg %p193
        %p400 = pneg %p217
        %p401 = pneg %p214
        %p402 = pneg %p243
        %p403 = pneg %p240
        %s404 = sand.u32 %s230, 1
        %s405 = scalar_lea.sflag [#allocation4], %s404
        %s406 = sand.u32 %s230, 1
        %s407 = smul.addr %s406, 128
        %s408 = scalar_lea.vmem [#allocation11], %s407
        %s409 = smul.u32 16, %s28
        %s410 = smul.u32 16, %s28
        %v411 = vld [vmem:[%s358] sm:$0xff]
        %v412 = vld [vmem:[%s358 + $0x8] sm:$0xff]
        %v413 = vld [vmem:[%s358 + $0x10] sm:$0xff]
        %v414 = vld [vmem:[%s358 + $0x18] sm:$0xff]
        %v415 = vld [vmem:[%s358 + $0x20] sm:$0xff]
        %v416 = vld [vmem:[%s358 + $0x28] sm:$0xff]
        %v417 = vld [vmem:[%s358 + $0x30] sm:$0xff]
        %v418 = vld [vmem:[%s358 + $0x38] sm:$0xff]
        %v419 = vld [vmem:[%s358 + $0x40] sm:$0xff]
        %v420 = vld [vmem:[%s358 + $0x48] sm:$0xff]
        %v421 = vld [vmem:[%s358 + $0x50] sm:$0xff]
        %v422 = vld [vmem:[%s358 + $0x58] sm:$0xff]
        %v423 = vld [vmem:[%s358 + $0x60] sm:$0xff]
        %v424 = vld [vmem:[%s358 + $0x68] sm:$0xff]
        %v425 = vld [vmem:[%s358 + $0x70] sm:$0xff]
        %v426 = vld [vmem:[%s358 + $0x78] sm:$0xff]
        %v427 = vld [vmem:[#allocation5] sm:$0xff]
        %v428 = vld [vmem:[#allocation5 + $0x8] sm:$0xff]
        %v429 = vld [vmem:[#allocation5 + $0x10] sm:$0xff]
        %v430 = vld [vmem:[#allocation5 + $0x18] sm:$0xff]
        %v431 = vld [vmem:[#allocation5 + $0x20] sm:$0xff]
        %v432 = vld [vmem:[#allocation5 + $0x28] sm:$0xff]
        %v433 = vld [vmem:[#allocation5 + $0x30] sm:$0xff]
        %v434 = vld [vmem:[#allocation5 + $0x38] sm:$0xff]
        %v435 = vld [vmem:[#allocation5 + $0x40] sm:$0xff]
        %v436 = vld [vmem:[#allocation5 + $0x48] sm:$0xff]
        %v437 = vld [vmem:[#allocation5 + $0x50] sm:$0xff]
        %v438 = vld [vmem:[#allocation5 + $0x58] sm:$0xff]
        %v439 = vld [vmem:[#allocation5 + $0x60] sm:$0xff]
        %v440 = vld [vmem:[#allocation5 + $0x68] sm:$0xff]
        %v441 = vld [vmem:[#allocation5 + $0x70] sm:$0xff]
        %v442 = vld [vmem:[#allocation5 + $0x78] sm:$0xff]
        %v443 = vld [vmem:[%s2] sm:$0x1]
        %v445 = vlaneseq
        %v446 = vshrl.u32 %v445, 7
        %v447 = vsub.s32 0, %v446
        %v448 = vrot.slane %v443, %v447
        %450 = vmatprep.subr.mxu0 0.0
        %451 = vmatpush1.msra.mxu0 %v427
        %452 = vmatprep.subr.mxu0 0.0
        %453 = vmatpush1.msra.mxu0 %v428
        %454 = vmatprep.subr.mxu0 0.0
        %455 = vmatpush1.msra.mxu0 %v429
        %456 = vmatprep.subr.mxu0 0.0
        %457 = vmatpush1.msra.mxu0 %v430
        %458 = vmatprep.subr.mxu0 0.0
        %459 = vmatpush1.msra.mxu0 %v431
        %460 = vmatprep.subr.mxu0 0.0
        %461 = vmatpush1.msra.mxu0 %v432
        %462 = vmatprep.subr.mxu0 0.0
        %463 = vmatpush1.msra.mxu0 %v433
        %464 = vmatprep.subr.mxu0 0.0
        %465 = vmatpush1.msra.mxu0 %v434
        %466 = vmatprep.subr.mxu0 0.0
        %467 = vmatpush1.msra.mxu0 %v435
        %468 = vmatprep.subr.mxu0 0.0
        %469 = vmatpush1.msra.mxu0 %v436
        %470 = vmatprep.subr.mxu0 0.0
        %471 = vmatpush1.msra.mxu0 %v437
        %472 = vmatprep.subr.mxu0 0.0
        %473 = vmatpush1.msra.mxu0 %v438
        %474 = vmatprep.subr.mxu0 0.0
        %475 = vmatpush1.msra.mxu0 %v439
        %476 = vmatprep.subr.mxu0 0.0
        %477 = vmatpush1.msra.mxu0 %v440
        %478 = vmatprep.subr.mxu0 0.0
        %479 = vmatpush1.msra.mxu0 %v441
        %480 = vmatprep.subr.mxu0 0.0
        %481 = vmatpush1.msra.mxu0 %v442
        %482 = vmatprep.subr.mxu0 0.0
        %483 = vmatpush1.msra.mxu0 0.0
        %484 = vmatprep.subr.mxu0 0.0
        %485 = vmatpush1.msra.mxu0 0.0
        %486 = vmatprep.subr.mxu0 0.0
        %487 = vmatpush1.msra.mxu0 0.0
        %488 = vmatprep.subr.mxu0 0.0
        %489 = vmatpush1.msra.mxu0 0.0
        %490 = vmatprep.subr.mxu0 0.0
        %491 = vmatpush1.msra.mxu0 0.0
        %492 = vmatprep.subr.mxu0 0.0
        %493 = vmatpush1.msra.mxu0 0.0
        %494 = vmatprep.subr.mxu0 0.0
        %495 = vmatpush1.msra.mxu0 0.0
        %496 = vmatprep.subr.mxu0 0.0
        %497 = vmatpush1.msra.mxu0 0.0
        %498 = vmatprep.subr.mxu0 0.0
        %499 = vmatpush1.msra.mxu0 0.0
        %500 = vmatprep.subr.mxu0 0.0
        %501 = vmatpush1.msra.mxu0 0.0
        %502 = vmatprep.subr.mxu0 0.0
        %503 = vmatpush1.msra.mxu0 0.0
        %504 = vmatprep.subr.mxu0 0.0
        %505 = vmatpush1.msra.mxu0 0.0
        %506 = vmatprep.subr.mxu0 0.0
        %507 = vmatpush1.msra.mxu0 0.0
        %508 = vmatprep.subr.mxu0 0.0
        %509 = vmatpush1.msra.mxu0 0.0
        %510 = vmatprep.subr.mxu0 0.0
        %511 = vmatpush1.msra.mxu0 0.0
        %512 = vmatprep.subr.mxu0 0.0
        %513 = vmatpush1.msra.mxu0 0.0
        %514 = vmatprep.mubr.f32.mxu0 0.0
        %515 = vmatmul.mubr.f32.gmra.mrb[0].mxu0 %v411
        %v516 = vpop.f32.mrb[0].mxu0
        %v517 = vadd.f32 %v448, %v516
        %v518 = vpop.f32.mrb[0].mxu0
        %519 = vmatprep.mubr.f32.mxu0 0.0
        %520 = vmatmul.mubr.f32.gmra.mrb[0].mxu0 %v412
        %v521 = vpop.f32.mrb[0].mxu0
        %v522 = vadd.f32 %v448, %v521
        %v523 = vpop.f32.mrb[0].mxu0
        %524 = vmatprep.mubr.f32.mxu0 0.0
        %525 = vmatmul.mubr.f32.gmra.mrb[0].mxu0 %v413
        %v526 = vpop.f32.mrb[0].mxu0
        %v527 = vadd.f32 %v448, %v526
        %v528 = vpop.f32.mrb[0].mxu0
        %529 = vmatprep.mubr.f32.mxu0 0.0
        %530 = vmatmul.mubr.f32.gmra.mrb[0].mxu0 %v414
        %v531 = vpop.f32.mrb[0].mxu0
        %v532 = vadd.f32 %v448, %v531
        %v533 = vpop.f32.mrb[0].mxu0
        %534 = vmatprep.mubr.f32.mxu0 0.0
        %535 = vmatmul.mubr.f32.gmra.mrb[0].mxu0 %v415
        %v536 = vpop.f32.mrb[0].mxu0
        %v537 = vadd.f32 %v448, %v536
        %v538 = vpop.f32.mrb[0].mxu0
        %539 = vmatprep.mubr.f32.mxu0 0.0
        %540 = vmatmul.mubr.f32.gmra.mrb[0].mxu0 %v416
        %v541 = vpop.f32.mrb[0].mxu0
        %v542 = vadd.f32 %v448, %v541
        %v543 = vpop.f32.mrb[0].mxu0
        %544 = vmatprep.mubr.f32.mxu0 0.0
        %545 = vmatmul.mubr.f32.gmra.mrb[0].mxu0 %v417
        %v546 = vpop.f32.mrb[0].mxu0
        %v547 = vadd.f32 %v448, %v546
        %v548 = vpop.f32.mrb[0].mxu0
        %549 = vmatprep.mubr.f32.mxu0 0.0
        %550 = vmatmul.mubr.f32.gmra.mrb[0].mxu0 %v418
        %v551 = vpop.f32.mrb[0].mxu0
        %v552 = vadd.f32 %v448, %v551
        %v553 = vpop.f32.mrb[0].mxu0
        %554 = vmatprep.mubr.f32.mxu0 0.0
        %555 = vmatmul.mubr.f32.gmra.mrb[0].mxu0 %v419
        %v556 = vpop.f32.mrb[0].mxu0
        %v557 = vadd.f32 %v448, %v556
        %v558 = vpop.f32.mrb[0].mxu0
        %559 = vmatprep.mubr.f32.mxu0 0.0
        %560 = vmatmul.mubr.f32.gmra.mrb[0].mxu0 %v420
        %v561 = vpop.f32.mrb[0].mxu0
        %v562 = vadd.f32 %v448, %v561
        %v563 = vpop.f32.mrb[0].mxu0
        %564 = vmatprep.mubr.f32.mxu0 0.0
        %565 = vmatmul.mubr.f32.gmra.mrb[0].mxu0 %v421
        %v566 = vpop.f32.mrb[0].mxu0
        %v567 = vadd.f32 %v448, %v566
        %v568 = vpop.f32.mrb[0].mxu0
        %569 = vmatprep.mubr.f32.mxu0 0.0
        %570 = vmatmul.mubr.f32.gmra.mrb[0].mxu0 %v422
        %v571 = vpop.f32.mrb[0].mxu0
        %v572 = vadd.f32 %v448, %v571
        %v573 = vpop.f32.mrb[0].mxu0
        %574 = vmatprep.mubr.f32.mxu0 0.0
        %575 = vmatmul.mubr.f32.gmra.mrb[0].mxu0 %v423
        %v576 = vpop.f32.mrb[0].mxu0
        %v577 = vadd.f32 %v448, %v576
        %v578 = vpop.f32.mrb[0].mxu0
        %579 = vmatprep.mubr.f32.mxu0 0.0
        %580 = vmatmul.mubr.f32.gmra.mrb[0].mxu0 %v424
        %v581 = vpop.f32.mrb[0].mxu0
        %v582 = vadd.f32 %v448, %v581
        %v583 = vpop.f32.mrb[0].mxu0
        %584 = vmatprep.mubr.f32.mxu0 0.0
        %585 = vmatmul.mubr.f32.gmra.mrb[0].mxu0 %v425
        %v586 = vpop.f32.mrb[0].mxu0
        %v587 = vadd.f32 %v448, %v586
        %v588 = vpop.f32.mrb[0].mxu0
        %589 = vmatprep.mubr.f32.mxu0 0.0
        %590 = vmatmul.mubr.f32.gmra.mrb[0].mxu0 %v426
        %v591 = vpop.f32.mrb[0].mxu0
        %v592 = vadd.f32 %v448, %v591
        %v593 = vpop.f32.mrb[0].mxu0
        %594 = vdwg.mxu0
        %v595 = vld [vmem:[#allocation7] sm:$0xff]
        %v596 = vld [vmem:[#allocation7 + $0x8] sm:$0xff]
        %v597 = vld [vmem:[#allocation7 + $0x10] sm:$0xff]
        %v598 = vld [vmem:[#allocation7 + $0x18] sm:$0xff]
        %v599 = vld [vmem:[#allocation7 + $0x20] sm:$0xff]
        %v600 = vld [vmem:[#allocation7 + $0x28] sm:$0xff]
        %v601 = vld [vmem:[#allocation7 + $0x30] sm:$0xff]
        %v602 = vld [vmem:[#allocation7 + $0x38] sm:$0xff]
        %v603 = vld [vmem:[#allocation7 + $0x40] sm:$0xff]
        %v604 = vld [vmem:[#allocation7 + $0x48] sm:$0xff]
        %v605 = vld [vmem:[#allocation7 + $0x50] sm:$0xff]
        %v606 = vld [vmem:[#allocation7 + $0x58] sm:$0xff]
        %v607 = vld [vmem:[#allocation7 + $0x60] sm:$0xff]
        %v608 = vld [vmem:[#allocation7 + $0x68] sm:$0xff]
        %v609 = vld [vmem:[#allocation7 + $0x70] sm:$0xff]
        %v610 = vld [vmem:[#allocation7 + $0x78] sm:$0xff]
        %v611 = vld [vmem:[%s4] sm:$0x1]
        %v613 = vlaneseq
        %v614 = vshrl.u32 %v613, 7
        %v615 = vsub.s32 0, %v614
        %v616 = vrot.slane %v611, %v615
        %618 = vmatprep.subr.mxu0 0.0
        %619 = vmatpush1.msra.mxu0 %v595
        %620 = vmatprep.subr.mxu0 0.0
        %621 = vmatpush1.msra.mxu0 %v596
        %622 = vmatprep.subr.mxu0 0.0
        %623 = vmatpush1.msra.mxu0 %v597
        %624 = vmatprep.subr.mxu0 0.0
        %625 = vmatpush1.msra.mxu0 %v598
        %626 = vmatprep.subr.mxu0 0.0
        %627 = vmatpush1.msra.mxu0 %v599
        %628 = vmatprep.subr.mxu0 0.0
        %629 = vmatpush1.msra.mxu0 %v600
        %630 = vmatprep.subr.mxu0 0.0
        %631 = vmatpush1.msra.mxu0 %v601
        %632 = vmatprep.subr.mxu0 0.0
        %633 = vmatpush1.msra.mxu0 %v602
        %634 = vmatprep.subr.mxu0 0.0
        %635 = vmatpush1.msra.mxu0 %v603
        %636 = vmatprep.subr.mxu0 0.0
        %637 = vmatpush1.msra.mxu0 %v604
        %638 = vmatprep.subr.mxu0 0.0
        %639 = vmatpush1.msra.mxu0 %v605
        %640 = vmatprep.subr.mxu0 0.0
        %641 = vmatpush1.msra.mxu0 %v606
        %642 = vmatprep.subr.mxu0 0.0
        %643 = vmatpush1.msra.mxu0 %v607
        %644 = vmatprep.subr.mxu0 0.0
        %645 = vmatpush1.msra.mxu0 %v608
        %646 = vmatprep.subr.mxu0 0.0
        %647 = vmatpush1.msra.mxu0 %v609
        %648 = vmatprep.subr.mxu0 0.0
        %649 = vmatpush1.msra.mxu0 %v610
        %650 = vmatprep.subr.mxu0 0.0
        %651 = vmatpush1.msra.mxu0 0.0
        %652 = vmatprep.subr.mxu0 0.0
        %653 = vmatpush1.msra.mxu0 0.0
        %654 = vmatprep.subr.mxu0 0.0
        %655 = vmatpush1.msra.mxu0 0.0
        %656 = vmatprep.subr.mxu0 0.0
        %657 = vmatpush1.msra.mxu0 0.0
        %658 = vmatprep.subr.mxu0 0.0
        %659 = vmatpush1.msra.mxu0 0.0
        %660 = vmatprep.subr.mxu0 0.0
        %661 = vmatpush1.msra.mxu0 0.0
        %662 = vmatprep.subr.mxu0 0.0
        %663 = vmatpush1.msra.mxu0 0.0
        %664 = vmatprep.subr.mxu0 0.0
        %665 = vmatpush1.msra.mxu0 0.0
        %666 = vmatprep.subr.mxu0 0.0
        %667 = vmatpush1.msra.mxu0 0.0
        %668 = vmatprep.subr.mxu0 0.0
        %669 = vmatpush1.msra.mxu0 0.0
        %670 = vmatprep.subr.mxu0 0.0
        %671 = vmatpush1.msra.mxu0 0.0
        %672 = vmatprep.subr.mxu0 0.0
        %673 = vmatpush1.msra.mxu0 0.0
        %674 = vmatprep.subr.mxu0 0.0
        %675 = vmatpush1.msra.mxu0 0.0
        %676 = vmatprep.subr.mxu0 0.0
        %677 = vmatpush1.msra.mxu0 0.0
        %678 = vmatprep.subr.mxu0 0.0
        %679 = vmatpush1.msra.mxu0 0.0
        %680 = vmatprep.subr.mxu0 0.0
        %681 = vmatpush1.msra.mxu0 0.0
        %682 = vmatprep.mubr.f32.mxu0 0.0
        %683 = vmatmul.mubr.f32.gmra.mrb[0].mxu0 %v517
        %v684 = vpop.f32.mrb[0].mxu0
        %v685 = vadd.f32 %v616, %v684
        %v686 = vpop.f32.mrb[0].mxu0
        %687 = vmatprep.mubr.f32.mxu0 0.0
        %688 = vmatmul.mubr.f32.gmra.mrb[0].mxu0 %v522
        %v689 = vpop.f32.mrb[0].mxu0
        %v690 = vadd.f32 %v616, %v689
        %v691 = vpop.f32.mrb[0].mxu0
        %692 = vmatprep.mubr.f32.mxu0 0.0
        %693 = vmatmul.mubr.f32.gmra.mrb[0].mxu0 %v527
        %v694 = vpop.f32.mrb[0].mxu0
        %v695 = vadd.f32 %v616, %v694
        %v696 = vpop.f32.mrb[0].mxu0
        %697 = vmatprep.mubr.f32.mxu0 0.0
        %698 = vmatmul.mubr.f32.gmra.mrb[0].mxu0 %v532
        %v699 = vpop.f32.mrb[0].mxu0
        %v700 = vadd.f32 %v616, %v699
        %v701 = vpop.f32.mrb[0].mxu0
        %702 = vmatprep.mubr.f32.mxu0 0.0
        %703 = vmatmul.mubr.f32.gmra.mrb[0].mxu0 %v537
        %v704 = vpop.f32.mrb[0].mxu0
        %v705 = vadd.f32 %v616, %v704
        %v706 = vpop.f32.mrb[0].mxu0
        %707 = vmatprep.mubr.f32.mxu0 0.0
        %708 = vmatmul.mubr.f32.gmra.mrb[0].mxu0 %v542
        %v709 = vpop.f32.mrb[0].mxu0
        %v710 = vadd.f32 %v616, %v709
        %v711 = vpop.f32.mrb[0].mxu0
        %712 = vmatprep.mubr.f32.mxu0 0.0
        %713 = vmatmul.mubr.f32.gmra.mrb[0].mxu0 %v547
        %v714 = vpop.f32.mrb[0].mxu0
        %v715 = vadd.f32 %v616, %v714
        %v716 = vpop.f32.mrb[0].mxu0
        %717 = vmatprep.mubr.f32.mxu0 0.0
        %718 = vmatmul.mubr.f32.gmra.mrb[0].mxu0 %v552
        %v719 = vpop.f32.mrb[0].mxu0
        %v720 = vadd.f32 %v616, %v719
        %v721 = vpop.f32.mrb[0].mxu0
        %722 = vmatprep.mubr.f32.mxu0 0.0
        %723 = vmatmul.mubr.f32.gmra.mrb[0].mxu0 %v557
        %v724 = vpop.f32.mrb[0].mxu0
        %v725 = vadd.f32 %v616, %v724
        %v726 = vpop.f32.mrb[0].mxu0
        %727 = vmatprep.mubr.f32.mxu0 0.0
        %728 = vmatmul.mubr.f32.gmra.mrb[0].mxu0 %v562
        %v729 = vpop.f32.mrb[0].mxu0
        %v730 = vadd.f32 %v616, %v729
        %v731 = vpop.f32.mrb[0].mxu0
        %732 = vmatprep.mubr.f32.mxu0 0.0
        %733 = vmatmul.mubr.f32.gmra.mrb[0].mxu0 %v567
        %v734 = vpop.f32.mrb[0].mxu0
        %v735 = vadd.f32 %v616, %v734
        %v736 = vpop.f32.mrb[0].mxu0
        %737 = vmatprep.mubr.f32.mxu0 0.0
        %738 = vmatmul.mubr.f32.gmra.mrb[0].mxu0 %v572
        %v739 = vpop.f32.mrb[0].mxu0
        %v740 = vadd.f32 %v616, %v739
        %v741 = vpop.f32.mrb[0].mxu0
        %742 = vmatprep.mubr.f32.mxu0 0.0
        %743 = vmatmul.mubr.f32.gmra.mrb[0].mxu0 %v577
        %v744 = vpop.f32.mrb[0].mxu0
        %v745 = vadd.f32 %v616, %v744
        %v746 = vpop.f32.mrb[0].mxu0
        %747 = vmatprep.mubr.f32.mxu0 0.0
        %748 = vmatmul.mubr.f32.gmra.mrb[0].mxu0 %v582
        %v749 = vpop.f32.mrb[0].mxu0
        %v750 = vadd.f32 %v616, %v749
        %v751 = vpop.f32.mrb[0].mxu0
        %752 = vmatprep.mubr.f32.mxu0 0.0
        %753 = vmatmul.mubr.f32.gmra.mrb[0].mxu0 %v587
        %v754 = vpop.f32.mrb[0].mxu0
        %v755 = vadd.f32 %v616, %v754
        %v756 = vpop.f32.mrb[0].mxu0
        %757 = vmatprep.mubr.f32.mxu0 0.0
        %758 = vmatmul.mubr.f32.gmra.mrb[0].mxu0 %v592
        %v759 = vpop.f32.mrb[0].mxu0
        %v760 = vadd.f32 %v616, %v759
        %v761 = vpop.f32.mrb[0].mxu0
        %762 = vdwg.mxu0
        %v763 = vmax.f32 %v685, 0.0
        %v764 = vmax.f32 %v690, 0.0
        %v765 = vmax.f32 %v695, 0.0
        %v766 = vmax.f32 %v700, 0.0
        %v767 = vmax.f32 %v705, 0.0
        %v768 = vmax.f32 %v710, 0.0
        %v769 = vmax.f32 %v715, 0.0
        %v770 = vmax.f32 %v720, 0.0
        %v771 = vmax.f32 %v725, 0.0
        %v772 = vmax.f32 %v730, 0.0
        %v773 = vmax.f32 %v735, 0.0
        %v774 = vmax.f32 %v740, 0.0
        %v775 = vmax.f32 %v745, 0.0
        %v776 = vmax.f32 %v750, 0.0
        %v777 = vmax.f32 %v755, 0.0
        %v778 = vmax.f32 %v760, 0.0
        %v779 = vld [vmem:[#allocation8] sm:$0xff]
        %v780 = vld [vmem:[#allocation8 + $0x8] sm:$0xff]
        %v781 = vld [vmem:[#allocation8 + $0x10] sm:$0xff]
        %v782 = vld [vmem:[#allocation8 + $0x18] sm:$0xff]
        %v783 = vld [vmem:[#allocation8 + $0x20] sm:$0xff]
        %v784 = vld [vmem:[#allocation8 + $0x28] sm:$0xff]
        %v785 = vld [vmem:[#allocation8 + $0x30] sm:$0xff]
        %v786 = vld [vmem:[#allocation8 + $0x38] sm:$0xff]
        %v787 = vld [vmem:[#allocation8 + $0x40] sm:$0xff]
        %v788 = vld [vmem:[#allocation8 + $0x48] sm:$0xff]
        %v789 = vld [vmem:[#allocation8 + $0x50] sm:$0xff]
        %v790 = vld [vmem:[#allocation8 + $0x58] sm:$0xff]
        %v791 = vld [vmem:[#allocation8 + $0x60] sm:$0xff]
        %v792 = vld [vmem:[#allocation8 + $0x68] sm:$0xff]
        %v793 = vld [vmem:[#allocation8 + $0x70] sm:$0xff]
        %v794 = vld [vmem:[#allocation8 + $0x78] sm:$0xff]
        %v795 = vld [vmem:[%s6] sm:$0x1]
        %v797 = vlaneseq
        %v798 = vshrl.u32 %v797, 7
        %v799 = vsub.s32 0, %v798
        %v800 = vrot.slane %v795, %v799
        %802 = vmatprep.subr.mxu0 0.0
        %803 = vmatpush1.msra.mxu0 %v779
        %804 = vmatprep.subr.mxu0 0.0
        %805 = vmatpush1.msra.mxu0 %v780
        %806 = vmatprep.subr.mxu0 0.0
        %807 = vmatpush1.msra.mxu0 %v781
        %808 = vmatprep.subr.mxu0 0.0
        %809 = vmatpush1.msra.mxu0 %v782
        %810 = vmatprep.subr.mxu0 0.0
        %811 = vmatpush1.msra.mxu0 %v783
        %812 = vmatprep.subr.mxu0 0.0
        %813 = vmatpush1.msra.mxu0 %v784
        %814 = vmatprep.subr.mxu0 0.0
        %815 = vmatpush1.msra.mxu0 %v785
        %816 = vmatprep.subr.mxu0 0.0
        %817 = vmatpush1.msra.mxu0 %v786
        %818 = vmatprep.subr.mxu0 0.0
        %819 = vmatpush1.msra.mxu0 %v787
        %820 = vmatprep.subr.mxu0 0.0
        %821 = vmatpush1.msra.mxu0 %v788
        %822 = vmatprep.subr.mxu0 0.0
        %823 = vmatpush1.msra.mxu0 %v789
        %824 = vmatprep.subr.mxu0 0.0
        %825 = vmatpush1.msra.mxu0 %v790
        %826 = vmatprep.subr.mxu0 0.0
        %827 = vmatpush1.msra.mxu0 %v791
        %828 = vmatprep.subr.mxu0 0.0
        %829 = vmatpush1.msra.mxu0 %v792
        %830 = vmatprep.subr.mxu0 0.0
        %831 = vmatpush1.msra.mxu0 %v793
        %832 = vmatprep.subr.mxu0 0.0
        %833 = vmatpush1.msra.mxu0 %v794
        %834 = vmatprep.subr.mxu0 0.0
        %835 = vmatpush1.msra.mxu0 0.0
        %836 = vmatprep.subr.mxu0 0.0
        %837 = vmatpush1.msra.mxu0 0.0
        %838 = vmatprep.subr.mxu0 0.0
        %839 = vmatpush1.msra.mxu0 0.0
        %840 = vmatprep.subr.mxu0 0.0
        %841 = vmatpush1.msra.mxu0 0.0
        %842 = vmatprep.subr.mxu0 0.0
        %843 = vmatpush1.msra.mxu0 0.0
        %844 = vmatprep.subr.mxu0 0.0
        %845 = vmatpush1.msra.mxu0 0.0
        %846 = vmatprep.subr.mxu0 0.0
        %847 = vmatpush1.msra.mxu0 0.0
        %848 = vmatprep.subr.mxu0 0.0
        %849 = vmatpush1.msra.mxu0 0.0
        %850 = vmatprep.subr.mxu0 0.0
        %851 = vmatpush1.msra.mxu0 0.0
        %852 = vmatprep.subr.mxu0 0.0
        %853 = vmatpush1.msra.mxu0 0.0
        %854 = vmatprep.subr.mxu0 0.0
        %855 = vmatpush1.msra.mxu0 0.0
        %856 = vmatprep.subr.mxu0 0.0
        %857 = vmatpush1.msra.mxu0 0.0
        %858 = vmatprep.subr.mxu0 0.0
        %859 = vmatpush1.msra.mxu0 0.0
        %860 = vmatprep.subr.mxu0 0.0
        %861 = vmatpush1.msra.mxu0 0.0
        %862 = vmatprep.subr.mxu0 0.0
        %863 = vmatpush1.msra.mxu0 0.0
        %864 = vmatprep.subr.mxu0 0.0
        %865 = vmatpush1.msra.mxu0 0.0
        %866 = vmatprep.mubr.f32.mxu0 0.0
        %867 = vmatmul.mubr.f32.gmra.mrb[0].mxu0 %v763
        %v868 = vpop.f32.mrb[0].mxu0
        %v869 = vadd.f32 %v800, %v868
        %v870 = vpop.f32.mrb[0].mxu0
        %871 = vmatprep.mubr.f32.mxu0 0.0
        %872 = vmatmul.mubr.f32.gmra.mrb[0].mxu0 %v764
        %v873 = vpop.f32.mrb[0].mxu0
        %v874 = vadd.f32 %v800, %v873
        %v875 = vpop.f32.mrb[0].mxu0
        %876 = vmatprep.mubr.f32.mxu0 0.0
        %877 = vmatmul.mubr.f32.gmra.mrb[0].mxu0 %v765
        %v878 = vpop.f32.mrb[0].mxu0
        %v879 = vadd.f32 %v800, %v878
        %v880 = vpop.f32.mrb[0].mxu0
        %881 = vmatprep.mubr.f32.mxu0 0.0
        %882 = vmatmul.mubr.f32.gmra.mrb[0].mxu0 %v766
        %v883 = vpop.f32.mrb[0].mxu0
        %v884 = vadd.f32 %v800, %v883
        %v885 = vpop.f32.mrb[0].mxu0
        %886 = vmatprep.mubr.f32.mxu0 0.0
        %887 = vmatmul.mubr.f32.gmra.mrb[0].mxu0 %v767
        %v888 = vpop.f32.mrb[0].mxu0
        %v889 = vadd.f32 %v800, %v888
        %v890 = vpop.f32.mrb[0].mxu0
        %891 = vmatprep.mubr.f32.mxu0 0.0
        %892 = vmatmul.mubr.f32.gmra.mrb[0].mxu0 %v768
        %v893 = vpop.f32.mrb[0].mxu0
        %v894 = vadd.f32 %v800, %v893
        %v895 = vpop.f32.mrb[0].mxu0
        %896 = vmatprep.mubr.f32.mxu0 0.0
        %897 = vmatmul.mubr.f32.gmra.mrb[0].mxu0 %v769
        %v898 = vpop.f32.mrb[0].mxu0
        %v899 = vadd.f32 %v800, %v898
        %v900 = vpop.f32.mrb[0].mxu0
        %901 = vmatprep.mubr.f32.mxu0 0.0
        %902 = vmatmul.mubr.f32.gmra.mrb[0].mxu0 %v770
        %v903 = vpop.f32.mrb[0].mxu0
        %v904 = vadd.f32 %v800, %v903
        %v905 = vpop.f32.mrb[0].mxu0
        %906 = vmatprep.mubr.f32.mxu0 0.0
        %907 = vmatmul.mubr.f32.gmra.mrb[0].mxu0 %v771
        %v908 = vpop.f32.mrb[0].mxu0
        %v909 = vadd.f32 %v800, %v908
        %v910 = vpop.f32.mrb[0].mxu0
        %911 = vmatprep.mubr.f32.mxu0 0.0
        %912 = vmatmul.mubr.f32.gmra.mrb[0].mxu0 %v772
        %v913 = vpop.f32.mrb[0].mxu0
        %v914 = vadd.f32 %v800, %v913
        %v915 = vpop.f32.mrb[0].mxu0
        %916 = vmatprep.mubr.f32.mxu0 0.0
        %917 = vmatmul.mubr.f32.gmra.mrb[0].mxu0 %v773
        %v918 = vpop.f32.mrb[0].mxu0
        %v919 = vadd.f32 %v800, %v918
        %v920 = vpop.f32.mrb[0].mxu0
        %921 = vmatprep.mubr.f32.mxu0 0.0
        %922 = vmatmul.mubr.f32.gmra.mrb[0].mxu0 %v774
        %v923 = vpop.f32.mrb[0].mxu0
        %v924 = vadd.f32 %v800, %v923
        %v925 = vpop.f32.mrb[0].mxu0
        %926 = vmatprep.mubr.f32.mxu0 0.0
        %927 = vmatmul.mubr.f32.gmra.mrb[0].mxu0 %v775
        %v928 = vpop.f32.mrb[0].mxu0
        %v929 = vadd.f32 %v800, %v928
        %v930 = vpop.f32.mrb[0].mxu0
        %931 = vmatprep.mubr.f32.mxu0 0.0
        %932 = vmatmul.mubr.f32.gmra.mrb[0].mxu0 %v776
        %v933 = vpop.f32.mrb[0].mxu0
        %v934 = vadd.f32 %v800, %v933
        %v935 = vpop.f32.mrb[0].mxu0
        %936 = vmatprep.mubr.f32.mxu0 0.0
        %937 = vmatmul.mubr.f32.gmra.mrb[0].mxu0 %v777
        %v938 = vpop.f32.mrb[0].mxu0
        %v939 = vadd.f32 %v800, %v938
        %v940 = vpop.f32.mrb[0].mxu0
        %941 = vmatprep.mubr.f32.mxu0 0.0
        %942 = vmatmul.mubr.f32.gmra.mrb[0].mxu0 %v778
        %v943 = vpop.f32.mrb[0].mxu0
        %v944 = vadd.f32 %v800, %v943
        %v945 = vpop.f32.mrb[0].mxu0
        %946 = vdwg.mxu0
        %v947 = vmax.f32 %v869, 0.0
        %v948 = vmax.f32 %v874, 0.0
        %v949 = vmax.f32 %v879, 0.0
        %v950 = vmax.f32 %v884, 0.0
        %v951 = vmax.f32 %v889, 0.0
        %v952 = vmax.f32 %v894, 0.0
        %v953 = vmax.f32 %v899, 0.0
        %v954 = vmax.f32 %v904, 0.0
        %v955 = vmax.f32 %v909, 0.0
        %v956 = vmax.f32 %v914, 0.0
        %v957 = vmax.f32 %v919, 0.0
        %v958 = vmax.f32 %v924, 0.0
        %v959 = vmax.f32 %v929, 0.0
        %v960 = vmax.f32 %v934, 0.0
        %v961 = vmax.f32 %v939, 0.0
        %v962 = vmax.f32 %v944, 0.0
        %v963 = vadd.f32 %v517, %v947
        %v964 = vadd.f32 %v522, %v948
        %v965 = vadd.f32 %v527, %v949
        %v966 = vadd.f32 %v532, %v950
        %v967 = vadd.f32 %v537, %v951
        %v968 = vadd.f32 %v542, %v952
        %v969 = vadd.f32 %v547, %v953
        %v970 = vadd.f32 %v552, %v954
        %v971 = vadd.f32 %v557, %v955
        %v972 = vadd.f32 %v562, %v956
        %v973 = vadd.f32 %v567, %v957
        %v974 = vadd.f32 %v572, %v958
        %v975 = vadd.f32 %v577, %v959
        %v976 = vadd.f32 %v582, %v960
        %v977 = vadd.f32 %v587, %v961
        %v978 = vadd.f32 %v592, %v962
        %v979 = vld [vmem:[#allocation10] sm:$0xff]
        %v980 = vld [vmem:[#allocation10 + $0x8] sm:$0xff]
        %v981 = vld [vmem:[#allocation10 + $0x10] sm:$0xff]
        %v982 = vld [vmem:[#allocation10 + $0x18] sm:$0xff]
        %v983 = vld [vmem:[#allocation10 + $0x20] sm:$0xff]
        %v984 = vld [vmem:[#allocation10 + $0x28] sm:$0xff]
        %v985 = vld [vmem:[#allocation10 + $0x30] sm:$0xff]
        %v986 = vld [vmem:[#allocation10 + $0x38] sm:$0xff]
        %v987 = vld [vmem:[#allocation10 + $0x40] sm:$0xff]
        %v988 = vld [vmem:[#allocation10 + $0x48] sm:$0xff]
        %v989 = vld [vmem:[#allocation10 + $0x50] sm:$0xff]
        %v990 = vld [vmem:[#allocation10 + $0x58] sm:$0xff]
        %v991 = vld [vmem:[#allocation10 + $0x60] sm:$0xff]
        %v992 = vld [vmem:[#allocation10 + $0x68] sm:$0xff]
        %v993 = vld [vmem:[#allocation10 + $0x70] sm:$0xff]
        %v994 = vld [vmem:[#allocation10 + $0x78] sm:$0xff]
        %v995 = vld [vmem:[%s8] sm:$0x1]
        %v997 = vlaneseq
        %v998 = vshrl.u32 %v997, 7
        %v999 = vsub.s32 0, %v998
        %v1000 = vrot.slane %v995, %v999
        %1002 = vmatprep.subr.mxu0 0.0
        %1003 = vmatpush1.msra.mxu0 %v979
        %1004 = vmatprep.subr.mxu0 0.0
        %1005 = vmatpush1.msra.mxu0 %v980
        %1006 = vmatprep.subr.mxu0 0.0
        %1007 = vmatpush1.msra.mxu0 %v981
        %1008 = vmatprep.subr.mxu0 0.0
        %1009 = vmatpush1.msra.mxu0 %v982
        %1010 = vmatprep.subr.mxu0 0.0
        %1011 = vmatpush1.msra.mxu0 %v983
        %1012 = vmatprep.subr.mxu0 0.0
        %1013 = vmatpush1.msra.mxu0 %v984
        %1014 = vmatprep.subr.mxu0 0.0
        %1015 = vmatpush1.msra.mxu0 %v985
        %1016 = vmatprep.subr.mxu0 0.0
        %1017 = vmatpush1.msra.mxu0 %v986
        %1018 = vmatprep.subr.mxu0 0.0
        %1019 = vmatpush1.msra.mxu0 %v987
        %1020 = vmatprep.subr.mxu0 0.0
        %1021 = vmatpush1.msra.mxu0 %v988
        %1022 = vmatprep.subr.mxu0 0.0
        %1023 = vmatpush1.msra.mxu0 %v989
        %1024 = vmatprep.subr.mxu0 0.0
        %1025 = vmatpush1.msra.mxu0 %v990
        %1026 = vmatprep.subr.mxu0 0.0
        %1027 = vmatpush1.msra.mxu0 %v991
        %1028 = vmatprep.subr.mxu0 0.0
        %1029 = vmatpush1.msra.mxu0 %v992
        %1030 = vmatprep.subr.mxu0 0.0
        %1031 = vmatpush1.msra.mxu0 %v993
        %1032 = vmatprep.subr.mxu0 0.0
        %1033 = vmatpush1.msra.mxu0 %v994
        %1034 = vmatprep.subr.mxu0 0.0
        %1035 = vmatpush1.msra.mxu0 0.0
        %1036 = vmatprep.subr.mxu0 0.0
        %1037 = vmatpush1.msra.mxu0 0.0
        %1038 = vmatprep.subr.mxu0 0.0
        %1039 = vmatpush1.msra.mxu0 0.0
        %1040 = vmatprep.subr.mxu0 0.0
        %1041 = vmatpush1.msra.mxu0 0.0
        %1042 = vmatprep.subr.mxu0 0.0
        %1043 = vmatpush1.msra.mxu0 0.0
        %1044 = vmatprep.subr.mxu0 0.0
        %1045 = vmatpush1.msra.mxu0 0.0
        %1046 = vmatprep.subr.mxu0 0.0
        %1047 = vmatpush1.msra.mxu0 0.0
        %1048 = vmatprep.subr.mxu0 0.0
        %1049 = vmatpush1.msra.mxu0 0.0
        %1050 = vmatprep.subr.mxu0 0.0
        %1051 = vmatpush1.msra.mxu0 0.0
        %1052 = vmatprep.subr.mxu0 0.0
        %1053 = vmatpush1.msra.mxu0 0.0
        %1054 = vmatprep.subr.mxu0 0.0
        %1055 = vmatpush1.msra.mxu0 0.0
        %1056 = vmatprep.subr.mxu0 0.0
        %1057 = vmatpush1.msra.mxu0 0.0
        %1058 = vmatprep.subr.mxu0 0.0
        %1059 = vmatpush1.msra.mxu0 0.0
        %1060 = vmatprep.subr.mxu0 0.0
        %1061 = vmatpush1.msra.mxu0 0.0
        %1062 = vmatprep.subr.mxu0 0.0
        %1063 = vmatpush1.msra.mxu0 0.0
        %1064 = vmatprep.subr.mxu0 0.0
        %1065 = vmatpush1.msra.mxu0 0.0
        %1066 = vmatprep.mubr.f32.mxu0 0.0
        %1067 = vmatmul.mubr.f32.gmra.mrb[0].mxu0 %v963
        %v1068 = vpop.f32.mrb[0].mxu0
        %v1069 = vadd.f32 %v1000, %v1068
        %v1070 = vpop.f32.mrb[0].mxu0
        %1071 = vmatprep.mubr.f32.mxu0 0.0
        %1072 = vmatmul.mubr.f32.gmra.mrb[0].mxu0 %v964
        %v1073 = vpop.f32.mrb[0].mxu0
        %v1074 = vadd.f32 %v1000, %v1073
        %v1075 = vpop.f32.mrb[0].mxu0
        %1076 = vmatprep.mubr.f32.mxu0 0.0
        %1077 = vmatmul.mubr.f32.gmra.mrb[0].mxu0 %v965
        %v1078 = vpop.f32.mrb[0].mxu0
        %v1079 = vadd.f32 %v1000, %v1078
        %v1080 = vpop.f32.mrb[0].mxu0
        %1081 = vmatprep.mubr.f32.mxu0 0.0
        %1082 = vmatmul.mubr.f32.gmra.mrb[0].mxu0 %v966
        %v1083 = vpop.f32.mrb[0].mxu0
        %v1084 = vadd.f32 %v1000, %v1083
        %v1085 = vpop.f32.mrb[0].mxu0
        %1086 = vmatprep.mubr.f32.mxu0 0.0
        %1087 = vmatmul.mubr.f32.gmra.mrb[0].mxu0 %v967
        %v1088 = vpop.f32.mrb[0].mxu0
        %v1089 = vadd.f32 %v1000, %v1088
        %v1090 = vpop.f32.mrb[0].mxu0
        %1091 = vmatprep.mubr.f32.mxu0 0.0
        %1092 = vmatmul.mubr.f32.gmra.mrb[0].mxu0 %v968
        %v1093 = vpop.f32.mrb[0].mxu0
        %v1094 = vadd.f32 %v1000, %v1093
        %v1095 = vpop.f32.mrb[0].mxu0
        %1096 = vmatprep.mubr.f32.mxu0 0.0
        %1097 = vmatmul.mubr.f32.gmra.mrb[0].mxu0 %v969
        %v1098 = vpop.f32.mrb[0].mxu0
        %v1099 = vadd.f32 %v1000, %v1098
        %v1100 = vpop.f32.mrb[0].mxu0
        %1101 = vmatprep.mubr.f32.mxu0 0.0
        %1102 = vmatmul.mubr.f32.gmra.mrb[0].mxu0 %v970
        %v1103 = vpop.f32.mrb[0].mxu0
        %v1104 = vadd.f32 %v1000, %v1103
        %v1105 = vpop.f32.mrb[0].mxu0
        %1106 = vmatprep.mubr.f32.mxu0 0.0
        %1107 = vmatmul.mubr.f32.gmra.mrb[0].mxu0 %v971
        %v1108 = vpop.f32.mrb[0].mxu0
        %v1109 = vadd.f32 %v1000, %v1108
        %v1110 = vpop.f32.mrb[0].mxu0
        %1111 = vmatprep.mubr.f32.mxu0 0.0
        %1112 = vmatmul.mubr.f32.gmra.mrb[0].mxu0 %v972
        %v1113 = vpop.f32.mrb[0].mxu0
        %v1114 = vadd.f32 %v1000, %v1113
        %v1115 = vpop.f32.mrb[0].mxu0
        %1116 = vmatprep.mubr.f32.mxu0 0.0
        %1117 = vmatmul.mubr.f32.gmra.mrb[0].mxu0 %v973
        %v1118 = vpop.f32.mrb[0].mxu0
        %v1119 = vadd.f32 %v1000, %v1118
        %v1120 = vpop.f32.mrb[0].mxu0
        %1121 = vmatprep.mubr.f32.mxu0 0.0
        %1122 = vmatmul.mubr.f32.gmra.mrb[0].mxu0 %v974
        %v1123 = vpop.f32.mrb[0].mxu0
        %v1124 = vadd.f32 %v1000, %v1123
        %v1125 = vpop.f32.mrb[0].mxu0
        %1126 = vmatprep.mubr.f32.mxu0 0.0
        %1127 = vmatmul.mubr.f32.gmra.mrb[0].mxu0 %v975
        %v1128 = vpop.f32.mrb[0].mxu0
        %v1129 = vadd.f32 %v1000, %v1128
        %v1130 = vpop.f32.mrb[0].mxu0
        %1131 = vmatprep.mubr.f32.mxu0 0.0
        %1132 = vmatmul.mubr.f32.gmra.mrb[0].mxu0 %v976
        %v1133 = vpop.f32.mrb[0].mxu0
        %v1134 = vadd.f32 %v1000, %v1133
        %v1135 = vpop.f32.mrb[0].mxu0
        %1136 = vmatprep.mubr.f32.mxu0 0.0
        %1137 = vmatmul.mubr.f32.gmra.mrb[0].mxu0 %v977
        %v1138 = vpop.f32.mrb[0].mxu0
        %v1139 = vadd.f32 %v1000, %v1138
        %v1140 = vpop.f32.mrb[0].mxu0
        %1141 = vmatprep.mubr.f32.mxu0 0.0
        %1142 = vmatmul.mubr.f32.gmra.mrb[0].mxu0 %v978
        %v1143 = vpop.f32.mrb[0].mxu0
        %v1144 = vadd.f32 %v1000, %v1143
        %v1145 = vpop.f32.mrb[0].mxu0
        %1146 = vdwg.mxu0
        %1147 = vst [vmem:[%s408] sm:$0xff] %v1069
        %1148 = vst [vmem:[%s408 + $0x8] sm:$0xff] %v1074
        %1149 = vst [vmem:[%s408 + $0x10] sm:$0xff] %v1079
        %1150 = vst [vmem:[%s408 + $0x18] sm:$0xff] %v1084
        %1151 = vst [vmem:[%s408 + $0x20] sm:$0xff] %v1089
        %1152 = vst [vmem:[%s408 + $0x28] sm:$0xff] %v1094
        %1153 = vst [vmem:[%s408 + $0x30] sm:$0xff] %v1099
        %1154 = vst [vmem:[%s408 + $0x38] sm:$0xff] %v1104
        %1155 = vst [vmem:[%s408 + $0x40] sm:$0xff] %v1109
        %1156 = vst [vmem:[%s408 + $0x48] sm:$0xff] %v1114
        %1157 = vst [vmem:[%s408 + $0x50] sm:$0xff] %v1119
        %1158 = vst [vmem:[%s408 + $0x58] sm:$0xff] %v1124
        %1159 = vst [vmem:[%s408 + $0x60] sm:$0xff] %v1129
        %1160 = vst [vmem:[%s408 + $0x68] sm:$0xff] %v1134
        %1161 = vst [vmem:[%s408 + $0x70] sm:$0xff] %v1139
        %1162 = vst [vmem:[%s408 + $0x78] sm:$0xff] %v1144
        %s1163 = sand.u32 %s230, 1
        %s1164 = scalar_lea.sflag [#allocation4], %s1163
        %s1165 = sand.u32 %s230, 1
        %s1166 = smul.addr %s1165, 128
        %s1167 = scalar_lea.vmem [#allocation11], %s1166
        // Predicated region
        $region77: #{tpu_custom_call.1} parent=55 // pred_check
          %p1168 = pneg %p240
        $region78: #{tpu_custom_call.1} parent=55 // pred_check_branch
          %1170 = sbr.rel (%p1168) target = $region80
        $region79: #{tpu_custom_call.1} parent=55 // pred_region
          %s1171 = smul.u32 16, %s28
          %s1173 = ssub.s32 2048, 2048
          %1174 = vsyncadd %s1164, %s1173
          %s1175 = smul.addr %s1171, 128
          %s1176 = scalar_lea.hbm %s9, %s1175
          %s1177 = sshll.u32 %s1167, 4
          %s1178 = int_to_ptr.vmem [resolvable:$true] %s1177
          %1183 = dma.vmem_to_hbm [thread:$0]  %s1178, 2048, %s1176, %s1164, 128, 128, 8
        $region80: #{tpu_custom_call.1} parent=55 // pred_fallthru
          _
      $region56: #{tpu_custom_call.1} parent=5 // pred_fallthru
        _
      %p1184 = scmp.le.s32.totalorder 2, %s23
      // Predicated region
      $region81: #{tpu_custom_call.1} parent=5 // pred_check
        %p1185 = pneg %p1184
      $region82: #{tpu_custom_call.1} parent=5 // pred_check_branch
        %1187 = sbr.rel (%p1185) target = $region84
      $region83: #{tpu_custom_call.1} parent=5 // pred_region
        %s1188 = ssub.s32 %s23, 2
        // Predicated region
        $region85: #{tpu_custom_call.1} parent=83 // pred_check
          %p1189 = pneg %p246
        $region86: #{tpu_custom_call.1} parent=83 // pred_check_branch
          %1191 = sbr.rel (%p1189) target = $region88
        $region87: #{tpu_custom_call.1} parent=83 // pred_region
          %s1192 = sand.u32 %s231, 1
          %s1193 = scalar_lea.sflag [#allocation4], %s1192
          %s1194 = sand.u32 %s231, 1
          %s1195 = smul.addr %s1194, 128
          %s1196 = scalar_lea.vmem [#allocation11], %s1195
          %1197 = dma.done %s1193, 2048
        $region88: #{tpu_custom_call.1} parent=83 // pred_fallthru
          _
      $region84: #{tpu_custom_call.1} parent=5 // pred_fallthru
        _
    $region6: #{tpu_custom_call.1} parent=1 // loop_footer
      %s27 = sadd.s32 1, %s23
    $region7: #{tpu_custom_call.1} parent=1 // loop_footer_branch
      %22 = sbr.rel target = $region3
    $region8: #{tpu_custom_call.1} parent=1 // loop_exit
      _
    %1198 = vsyncpa [#allocation3], 1
    %s1199 = scalar_lea.sflag [#allocation3], 1
    %1200 = vsyncpa %s1199, 1
    %1201 = vsyncpa [#allocation6], 1
    %1202 = vsyncpa [#allocation9], 1
    %1203 = vsyncpa [#allocation4], 1
    %s1204 = scalar_lea.sflag [#allocation4], 1
    %1205 = vsyncpa %s1204, 1

</llo_original>
